<compile_context>
chip_gen: v7x
topology: tpu7x:2x2x1
jax: 0.10.0
libtpu: 0.0.40
codegen_flags: <defaults>
</compile_context>

<pallas_src>
import functools

import jax
import jax.numpy as jnp
import numpy as np
from jax.experimental import pallas as pl
from jax.experimental.pallas import tpu as pltpu

_LANE = 128  # lane width / MXU column granularity


def _round_up(x, m):
    return ((x + m - 1) // m) * m


def _mlp_kernel(*refs, num_layers):
    """Fused MLP kernel for one batch tile.

    refs = (x_ref, w0_ref, b0_ref, w1_ref, b1_ref, ..., out_ref)
      x_ref  : [TM, D0_pad]      f32
      wi_ref : [in_pad, out_pad] bf16 (pre-transposed, zero-padded)
      bi_ref : [1, out_pad]      f32
      out_ref: [TM, Dout_pad]    f32
    """
    x_ref = refs[0]
    out_ref = refs[-1]
    param_refs = refs[1:-1]

    h = x_ref[...]  # f32 activations
    for layer in range(num_layers):
        w = param_refs[2 * layer][...]        # [in_pad, out_pad] bf16
        b = param_refs[2 * layer + 1][...]    # [1, out_pad] f32
        # bf16 inputs -> MXU, f32 accumulation; bias/ReLU in f32.
        acc = jnp.dot(h.astype(jnp.bfloat16), w,
                      preferred_element_type=jnp.float32)
        h = acc + b
        if layer != num_layers - 1:
            h = jnp.maximum(h, 0.0)
    out_ref[...] = h.astype(out_ref.dtype)


def prepare_mlp_params(weights, biases):
    """One-time conversion from PyTorch layout to kernel layout.

    weights[i]: [out, in]  ->  bf16 [in_pad, out_pad]  (transposed, zero-padded)
    biases[i] : [out]      ->  f32  [1, out_pad]       (zero-padded)

    Returns (params_list, dims_pad) where dims_pad[i] is the padded feature
    dim between layer i-1 and i (dims_pad[0] = padded input dim).
    """
    dims_logical = [weights[0].shape[1]] + [w.shape[0] for w in weights]
    dims_pad = tuple(_round_up(d, _LANE) for d in dims_logical)

    params = []
    for i, (w, b) in enumerate(zip(weights, biases)):
        in_p, out_p = dims_pad[i], dims_pad[i + 1]
        wt = jnp.asarray(w, jnp.float32).T                       # [in, out]
        wt = jnp.pad(wt, ((0, in_p - wt.shape[0]),
                          (0, out_p - wt.shape[1])))
        params.append(wt.astype(jnp.bfloat16))
        bb = jnp.pad(jnp.asarray(b, jnp.float32), (0, out_p - b.shape[0]))
        params.append(bb.reshape(1, -1))
    return params, dims_pad


def mlp_forward(x, params, dims_pad, output_dim, block_m=128):
    """Fused MLP forward.

    x        : [B, C, H, W] (NCHW, like PyTorch)
    params   : output of prepare_mlp_params (already transposed/padded/cast)
    dims_pad : static tuple of padded feature dims
    output_dim: true (unpadded) output feature count
    block_m  : max batch tile (MXU-aligned; clamped for tiny batches)
    """
    batch = x.shape[0]
    x_flat = x.reshape(batch, -1).astype(jnp.float32)   # torch.flatten(x, 1)

    d0, d_out_pad = dims_pad[0], dims_pad[-1]
    if x_flat.shape[1] != d0:                            # pad K of first layer
        x_flat = jnp.pad(x_flat, ((0, 0), (0, d0 - x_flat.shape[1])))

    # Batch tile: multiple of 8 sublanes, capped at block_m (128 default).
    tm = min(block_m, _round_up(batch, 8))
    b_pad = _round_up(batch, tm)
    if b_pad != batch:
        x_flat = jnp.pad(x_flat, ((0, b_pad - batch), (0, 0)))

    num_layers = len(params) // 2
    grid = (b_pad // tm,)

    in_specs = [pl.BlockSpec((tm, d0), lambda i: (i, 0))]
    for layer in range(num_layers):
        in_p, out_p = dims_pad[layer], dims_pad[layer + 1]
        in_specs.append(pl.BlockSpec((in_p, out_p), lambda i: (0, 0)))  # weight
        in_specs.append(pl.BlockSpec((1, out_p), lambda i: (0, 0)))     # bias
    out_specs = pl.BlockSpec((tm, d_out_pad), lambda i: (i, 0))

    # VMEM budget: double-buffered x/out tiles + resident params + activations.
    tile_bytes = 2 * (tm * d0 * 4 + tm * d_out_pad * 4)
    param_bytes = sum(int(np.prod(p.shape)) * p.dtype.itemsize for p in params)
    act_bytes = 4 * tm * max(dims_pad)
    vmem_limit = int(min(128 * 1024 * 1024,
                         max(32 * 1024 * 1024,
                             2 * (tile_bytes + param_bytes + 2 * act_bytes))))

    flops = 2 * b_pad * sum(dims_pad[i] * dims_pad[i + 1]
                            for i in range(num_layers))
    bytes_accessed = b_pad * (d0 + d_out_pad) * 4 + param_bytes
    cost = pl.CostEstimate(flops=int(flops), transcendentals=0,
                           bytes_accessed=int(bytes_accessed))

    kernel = functools.partial(_mlp_kernel, num_layers=num_layers)
    out = pl.pallas_call(
        kernel,
        out_shape=jax.ShapeDtypeStruct((b_pad, d_out_pad), jnp.float32),
        grid=grid,
        in_specs=in_specs,
        out_specs=out_specs,
        compiler_params=pltpu.CompilerParams(
            dimension_semantics=("parallel",),
            vmem_limit_bytes=vmem_limit),
        cost_estimate=cost,
    )(x_flat, *params)

    return out[:batch, :output_dim]


def init_mlp_params(canvas, key):
    """Deterministic parameter init mimicking nn.Linear default init shapes."""
    input_dim, width, depth, output_dim = canvas
    dims = [input_dim] + [width] * depth + [output_dim]
    weights, biases = [], []
    for i in range(len(dims) - 1):
        fan_in, fan_out = dims[i], dims[i + 1]
        key, kw, kb = jax.random.split(key, 3)
        bound = 1.0 / np.sqrt(fan_in)
        # PyTorch convention: weight shape [out_features, in_features]
        w = jax.random.uniform(kw, (fan_out, fan_in), jnp.float32,
                               minval=-bound, maxval=bound)
        b = jax.random.uniform(kb, (fan_out,), jnp.float32,
                               minval=-bound, maxval=bound)
        weights.append(w)
        biases.append(b)
    return weights, biases


def mlp_reference(x, weights, biases):
    """Pure-JAX reference (same bf16-matmul / f32-accumulate recipe)."""
    h = x.reshape(x.shape[0], -1).astype(jnp.float32)
    n = len(weights)
    for i, (w, b) in enumerate(zip(weights, biases)):
        acc = jnp.dot(h.astype(jnp.bfloat16),
                      jnp.asarray(w, jnp.float32).T.astype(jnp.bfloat16),
                      preferred_element_type=jnp.float32)
        h = acc + jnp.asarray(b, jnp.float32)
        if i != n - 1:
            h = jnp.maximum(h, 0.0)
    return h


if __name__ == "__main__":
    # canvas = (input_dim, width, depth, output_dim)
    B, C, H, W = 2, 4, 16, 16
    canvas = (C * H * W, 32, 3, 8)  # input_dim=1024, width=32, depth=3, out=8

    key = jax.random.PRNGKey(0)
    key, kx = jax.random.split(key)
    x = jax.random.normal(kx, (B, C, H, W), dtype=jnp.float32)

    weights, biases = init_mlp_params(canvas, key)
    # One-time param prep (transpose / pad / bf16-cast) -- NOT per forward.
    params, dims_pad = prepare_mlp_params(weights, biases)

    fwd = jax.jit(mlp_forward, static_argnums=(2, 3, 4))
    out = fwd(x, params, dims_pad, canvas[-1], 128)
    out = jax.block_until_ready(out)

    ref = mlp_reference(x, weights, biases)
    # bf16 MXU inputs with f32 accumulation in both paths -> loose-ish tol.
    np.testing.assert_allclose(np.asarray(out), np.asarray(ref),
                               rtol=1e-2, atol=1e-2)

    print("KERNEL_OK")
</pallas_src>

<mosaic_0001>
module attributes {stable_mosaic.version = 11 : i64} {
  func.func @_mlp_kernel(%arg0: i32, %arg1: memref<8x1024xf32, #tpu.memory_space<vmem>>, %arg2: memref<1024x128xbf16, #tpu.memory_space<vmem>>, %arg3: memref<1x128xf32, #tpu.memory_space<vmem>>, %arg4: memref<128x128xbf16, #tpu.memory_space<vmem>>, %arg5: memref<1x128xf32, #tpu.memory_space<vmem>>, %arg6: memref<128x128xbf16, #tpu.memory_space<vmem>>, %arg7: memref<1x128xf32, #tpu.memory_space<vmem>>, %arg8: memref<128x128xbf16, #tpu.memory_space<vmem>>, %arg9: memref<1x128xf32, #tpu.memory_space<vmem>>, %arg10: memref<8x128xf32, #tpu.memory_space<vmem>>) attributes {dimension_semantics = [#tpu.dimension_semantics<parallel>], iteration_bounds = array<i64: 1>, scalar_prefetch = 0 : i64, scratch_operands = 0 : i64, tpu.core_type = #tpu.core_type<tc>, window_params = [{transform_indices = @transform_0, window_bounds = array<i64: 8, 1024>}, {pipeline_mode = #tpu.pipeline_mode<synchronous>, transform_indices = @transform_1, window_bounds = array<i64: 1024, 128>}, {pipeline_mode = #tpu.pipeline_mode<synchronous>, transform_indices = @transform_2, window_bounds = array<i64: 1, 128>}, {pipeline_mode = #tpu.pipeline_mode<synchronous>, transform_indices = @transform_3, window_bounds = array<i64: 128, 128>}, {pipeline_mode = #tpu.pipeline_mode<synchronous>, transform_indices = @transform_4, window_bounds = array<i64: 1, 128>}, {pipeline_mode = #tpu.pipeline_mode<synchronous>, transform_indices = @transform_5, window_bounds = array<i64: 128, 128>}, {pipeline_mode = #tpu.pipeline_mode<synchronous>, transform_indices = @transform_6, window_bounds = array<i64: 1, 128>}, {pipeline_mode = #tpu.pipeline_mode<synchronous>, transform_indices = @transform_7, window_bounds = array<i64: 128, 128>}, {pipeline_mode = #tpu.pipeline_mode<synchronous>, transform_indices = @transform_8, window_bounds = array<i64: 1, 128>}, {transform_indices = @transform_9, window_bounds = array<i64: 8, 128>}]} {
    %c0 = arith.constant 0 : index
    %c0_0 = arith.constant 0 : index
    %0 = vector.load %arg1[%c0, %c0_0] : memref<8x1024xf32, #tpu.memory_space<vmem>>, vector<8x1024xf32>
    %c0_1 = arith.constant 0 : index
    %c0_2 = arith.constant 0 : index
    %1 = vector.load %arg2[%c0_1, %c0_2] : memref<1024x128xbf16, #tpu.memory_space<vmem>>, vector<1024x128xbf16>
    %c0_3 = arith.constant 0 : index
    %c0_4 = arith.constant 0 : index
    %2 = vector.load %arg3[%c0_3, %c0_4] : memref<1x128xf32, #tpu.memory_space<vmem>>, vector<1x128xf32>
    %3 = arith.truncf %0 : vector<8x1024xf32> to vector<8x1024xbf16>
    %cst = arith.constant dense<0.000000e+00> : vector<8x128xf32>
    %4 = tpu.matmul %3, %1, %cst {dimension_numbers = #tpu.dot_dimension_numbers<[1], [0], [0], [1], [0, 0, 1, 1], [], []>} : vector<8x1024xbf16>, vector<1024x128xbf16>, vector<8x128xf32> -> vector<8x128xf32>
    %5 = vector.broadcast %2 : vector<1x128xf32> to vector<8x128xf32>
    %6 = arith.addf %4, %5 : vector<8x128xf32>
    %cst_5 = arith.constant 0.000000e+00 : f32
    %7 = vector.broadcast %cst_5 : f32 to vector<8x128xf32>
    %8 = arith.maximumf %6, %7 : vector<8x128xf32>
    %c0_6 = arith.constant 0 : index
    %c0_7 = arith.constant 0 : index
    %9 = vector.load %arg4[%c0_6, %c0_7] : memref<128x128xbf16, #tpu.memory_space<vmem>>, vector<128x128xbf16>
    %c0_8 = arith.constant 0 : index
    %c0_9 = arith.constant 0 : index
    %10 = vector.load %arg5[%c0_8, %c0_9] : memref<1x128xf32, #tpu.memory_space<vmem>>, vector<1x128xf32>
    %11 = arith.truncf %8 : vector<8x128xf32> to vector<8x128xbf16>
    %cst_10 = arith.constant dense<0.000000e+00> : vector<8x128xf32>
    %12 = tpu.matmul %11, %9, %cst_10 {dimension_numbers = #tpu.dot_dimension_numbers<[1], [0], [0], [1], [0, 0, 1, 1], [], []>} : vector<8x128xbf16>, vector<128x128xbf16>, vector<8x128xf32> -> vector<8x128xf32>
    %13 = vector.broadcast %10 : vector<1x128xf32> to vector<8x128xf32>
    %14 = arith.addf %12, %13 : vector<8x128xf32>
    %cst_11 = arith.constant 0.000000e+00 : f32
    %15 = vector.broadcast %cst_11 : f32 to vector<8x128xf32>
    %16 = arith.maximumf %14, %15 : vector<8x128xf32>
    %c0_12 = arith.constant 0 : index
    %c0_13 = arith.constant 0 : index
    %17 = vector.load %arg6[%c0_12, %c0_13] : memref<128x128xbf16, #tpu.memory_space<vmem>>, vector<128x128xbf16>
    %c0_14 = arith.constant 0 : index
    %c0_15 = arith.constant 0 : index
    %18 = vector.load %arg7[%c0_14, %c0_15] : memref<1x128xf32, #tpu.memory_space<vmem>>, vector<1x128xf32>
    %19 = arith.truncf %16 : vector<8x128xf32> to vector<8x128xbf16>
    %cst_16 = arith.constant dense<0.000000e+00> : vector<8x128xf32>
    %20 = tpu.matmul %19, %17, %cst_16 {dimension_numbers = #tpu.dot_dimension_numbers<[1], [0], [0], [1], [0, 0, 1, 1], [], []>} : vector<8x128xbf16>, vector<128x128xbf16>, vector<8x128xf32> -> vector<8x128xf32>
    %21 = vector.broadcast %18 : vector<1x128xf32> to vector<8x128xf32>
    %22 = arith.addf %20, %21 : vector<8x128xf32>
    %cst_17 = arith.constant 0.000000e+00 : f32
    %23 = vector.broadcast %cst_17 : f32 to vector<8x128xf32>
    %24 = arith.maximumf %22, %23 : vector<8x128xf32>
    %c0_18 = arith.constant 0 : index
    %c0_19 = arith.constant 0 : index
    %25 = vector.load %arg8[%c0_18, %c0_19] : memref<128x128xbf16, #tpu.memory_space<vmem>>, vector<128x128xbf16>
    %c0_20 = arith.constant 0 : index
    %c0_21 = arith.constant 0 : index
    %26 = vector.load %arg9[%c0_20, %c0_21] : memref<1x128xf32, #tpu.memory_space<vmem>>, vector<1x128xf32>
    %27 = arith.truncf %24 : vector<8x128xf32> to vector<8x128xbf16>
    %cst_22 = arith.constant dense<0.000000e+00> : vector<8x128xf32>
    %28 = tpu.matmul %27, %25, %cst_22 {dimension_numbers = #tpu.dot_dimension_numbers<[1], [0], [0], [1], [0, 0, 1, 1], [], []>} : vector<8x128xbf16>, vector<128x128xbf16>, vector<8x128xf32> -> vector<8x128xf32>
    %29 = vector.broadcast %26 : vector<1x128xf32> to vector<8x128xf32>
    %30 = arith.addf %28, %29 : vector<8x128xf32>
    %c0_23 = arith.constant 0 : index
    %c0_24 = arith.constant 0 : index
    %31 = vector.load %arg10[%c0_23, %c0_24] : memref<8x128xf32, #tpu.memory_space<vmem>>, vector<8x128xf32>
    tpu.vector_store %arg10[%c0_23, %c0_24], %30 {strides = array<i32>} : memref<8x128xf32, #tpu.memory_space<vmem>>, vector<8x128xf32>,
    return
  }
  func.func @transform_0(%arg0: i32) -> (i32, i32) {
    %c0_i32 = arith.constant 0 : i32
    %c0_i32_0 = arith.constant 0 : i32
    return %arg0, %c0_i32 : i32, i32
  }
  func.func @transform_1(%arg0: i32) -> (i32, i32) {
    %c0_i32 = arith.constant 0 : i32
    %c0_i32_0 = arith.constant 0 : i32
    %c0_i32_1 = arith.constant 0 : i32
    return %c0_i32, %c0_i32_0 : i32, i32
  }
  func.func @transform_2(%arg0: i32) -> (i32, i32) {
    %c0_i32 = arith.constant 0 : i32
    %c0_i32_0 = arith.constant 0 : i32
    %c0_i32_1 = arith.constant 0 : i32
    return %c0_i32, %c0_i32_0 : i32, i32
  }
  func.func @transform_3(%arg0: i32) -> (i32, i32) {
    %c0_i32 = arith.constant 0 : i32
    %c0_i32_0 = arith.constant 0 : i32
    %c0_i32_1 = arith.constant 0 : i32
    return %c0_i32, %c0_i32_0 : i32, i32
  }
  func.func @transform_4(%arg0: i32) -> (i32, i32) {
    %c0_i32 = arith.constant 0 : i32
    %c0_i32_0 = arith.constant 0 : i32
    %c0_i32_1 = arith.constant 0 : i32
    return %c0_i32, %c0_i32_0 : i32, i32
  }
  func.func @transform_5(%arg0: i32) -> (i32, i32) {
    %c0_i32 = arith.constant 0 : i32
    %c0_i32_0 = arith.constant 0 : i32
    %c0_i32_1 = arith.constant 0 : i32
    return %c0_i32, %c0_i32_0 : i32, i32
  }
  func.func @transform_6(%arg0: i32) -> (i32, i32) {
    %c0_i32 = arith.constant 0 : i32
    %c0_i32_0 = arith.constant 0 : i32
    %c0_i32_1 = arith.constant 0 : i32
    return %c0_i32, %c0_i32_0 : i32, i32
  }
  func.func @transform_7(%arg0: i32) -> (i32, i32) {
    %c0_i32 = arith.constant 0 : i32
    %c0_i32_0 = arith.constant 0 : i32
    %c0_i32_1 = arith.constant 0 : i32
    return %c0_i32, %c0_i32_0 : i32, i32
  }
  func.func @transform_8(%arg0: i32) -> (i32, i32) {
    %c0_i32 = arith.constant 0 : i32
    %c0_i32_0 = arith.constant 0 : i32
    %c0_i32_1 = arith.constant 0 : i32
    return %c0_i32, %c0_i32_0 : i32, i32
  }
  func.func @transform_9(%arg0: i32) -> (i32, i32) {
    %c0_i32 = arith.constant 0 : i32
    %c0_i32_0 = arith.constant 0 : i32
    return %arg0, %c0_i32 : i32, i32
  }
}

</mosaic_0001>

<llo_original>
// kernel: mlp_forward.1
$region0: #{mlp_forward.1}
  #allocation0 [shape = 'u32[]', space=smem, size = 0x4, offset = 0x4, fixed_abs, tag = 'smem constant byte address 0x4 - core index']
  #allocation1 [shape = 'u32[144,128]{1,0:T(1,128)}', space=vmem, size = 0x12000, scoped, tag = 'internal scratch']
  %s0 = inlined_call_operand.vmem [shape: f32[8,1024], index: 0, kind: input, shape index: {}]
  %s1 = inlined_call_operand.hbm [shape: bf16[1024,128], index: 1, kind: input, shape index: {}]
  %s2 = inlined_call_operand.vmem [shape: f32[1,128], index: 2, kind: input, shape index: {}]
  %s3 = inlined_call_operand.vmem [shape: bf16[128,128], index: 3, kind: input, shape index: {}]
  %s4 = inlined_call_operand.vmem [shape: f32[1,128], index: 4, kind: input, shape index: {}]
  %s5 = inlined_call_operand.vmem [shape: bf16[128,128], index: 5, kind: input, shape index: {}]
  %s6 = inlined_call_operand.vmem [shape: f32[1,128], index: 6, kind: input, shape index: {}]
  %s7 = inlined_call_operand.vmem [shape: bf16[128,128], index: 7, kind: input, shape index: {}]
  %s8 = inlined_call_operand.vmem [shape: f32[1,128], index: 8, kind: input, shape index: {}]
  %s9 = inlined_call_operand.vmem [shape: f32[8,128], index: 9, kind: output, shape index: {}]
  %s10 = sld [smem:[#allocation0]]
  $region50: #{mlp_forward.1} parent=0
    _
  %s12 = ssub.s32 1, %s10
  %s13 = scalar_select 0, %s12, %s10
  $region1: #{mlp_forward.1} parent=0
    #allocation2 [shape = 'u8[262144]{0}', space=vmem, size = 0x40000, scoped, tag = 'input window, operand 1, single buffered']
    #allocation3 [shape = 's32[1]{0}', space=sflag, size = 0x4, scoped, tag = 'scoped memory for mlp_forward.1']
    %14 = vsyncpa [#allocation3], 0
    // Predicated region
    $region2: #{mlp_forward.1} parent=1 // pred_check
      _
    $region3: #{mlp_forward.1} parent=1 // pred_check_branch
      %16 = sbr.rel (0) target = $region5
    $region4: #{mlp_forward.1} parent=1 // pred_region
      _
    $region5: #{mlp_forward.1} parent=1 // pred_fallthru
      _
    // Predicated region
    $region6: #{mlp_forward.1} parent=1 // pred_check
      _
    $region7: #{mlp_forward.1} parent=1 // pred_check_branch
      %18 = sbr.rel (0) target = $region9
    $region8: #{mlp_forward.1} parent=1 // pred_region
      %s20 = ssub.s32 8192, 8192
      %21 = vsyncadd [#allocation3], %s20
      %s22 = sshll.u32 [#allocation2], 4
      %s23 = int_to_ptr.vmem [resolvable:$true] %s22
      %28 = dma.hbm_to_vmem [thread:$0]  %s1, 8192, %s23, [#allocation3], 64, 64, 4
    $region9: #{mlp_forward.1} parent=1 // pred_fallthru
      _
    // Predicated region
    $region10: #{mlp_forward.1} parent=1 // pred_check
      _
    $region11: #{mlp_forward.1} parent=1 // pred_check_branch
      %30 = sbr.rel (0) target = $region13
    $region12: #{mlp_forward.1} parent=1 // pred_region
      _
    $region13: #{mlp_forward.1} parent=1 // pred_fallthru
      _
    // Predicated region
    $region14: #{mlp_forward.1} parent=1 // pred_check
      _
    $region15: #{mlp_forward.1} parent=1 // pred_check_branch
      %32 = sbr.rel (0) target = $region17
    $region16: #{mlp_forward.1} parent=1 // pred_region
      _
    $region17: #{mlp_forward.1} parent=1 // pred_fallthru
      _
    // Predicated region
    $region18: #{mlp_forward.1} parent=1 // pred_check
      _
    $region19: #{mlp_forward.1} parent=1 // pred_check_branch
      %34 = sbr.rel (0) target = $region21
    $region20: #{mlp_forward.1} parent=1 // pred_region
      _
    $region21: #{mlp_forward.1} parent=1 // pred_fallthru
      _
    // Predicated region
    $region22: #{mlp_forward.1} parent=1 // pred_check
      _
    $region23: #{mlp_forward.1} parent=1 // pred_check_branch
      %36 = sbr.rel (0) target = $region25
    $region24: #{mlp_forward.1} parent=1 // pred_region
      _
    $region25: #{mlp_forward.1} parent=1 // pred_fallthru
      _
    // Predicated region
    $region26: #{mlp_forward.1} parent=1 // pred_check
      _
    $region27: #{mlp_forward.1} parent=1 // pred_check_branch
      %38 = sbr.rel (0) target = $region29
    $region28: #{mlp_forward.1} parent=1 // pred_region
      _
    $region29: #{mlp_forward.1} parent=1 // pred_fallthru
      _
    // Predicated region
    $region30: #{mlp_forward.1} parent=1 // pred_check
      _
    $region31: #{mlp_forward.1} parent=1 // pred_check_branch
      %40 = sbr.rel (0) target = $region33
    $region32: #{mlp_forward.1} parent=1 // pred_region
      _
    $region33: #{mlp_forward.1} parent=1 // pred_fallthru
      _
    // Predicated region
    $region34: #{mlp_forward.1} parent=1 // pred_check
      _
    $region35: #{mlp_forward.1} parent=1 // pred_check_branch
      %42 = sbr.rel (0) target = $region37
    $region36: #{mlp_forward.1} parent=1 // pred_region
      _
    $region37: #{mlp_forward.1} parent=1 // pred_fallthru
      _
    // Predicated region
    $region38: #{mlp_forward.1} parent=1 // pred_check
      _
    $region39: #{mlp_forward.1} parent=1 // pred_check_branch
      %44 = sbr.rel (0) target = $region41
    $region40: #{mlp_forward.1} parent=1 // pred_region
      %45 = dma.done [#allocation3], 8192
    $region41: #{mlp_forward.1} parent=1 // pred_fallthru
      _
    %v47 = vld [vmem:[%s0] sm:$0xff]
    %v48 = vld [vmem:[%s0 + $0x8] sm:$0xff]
    %v49 = vld [vmem:[%s0 + $0x10] sm:$0xff]
    %v50 = vld [vmem:[%s0 + $0x18] sm:$0xff]
    %v51 = vld [vmem:[%s0 + $0x20] sm:$0xff]
    %v52 = vld [vmem:[%s0 + $0x28] sm:$0xff]
    %v53 = vld [vmem:[%s0 + $0x30] sm:$0xff]
    %v54 = vld [vmem:[%s0 + $0x38] sm:$0xff]
    %v55 = vld [vmem:[#allocation2] sm:$0xf]
    %v56 = vld [vmem:[#allocation2 + $0x4] sm:$0xf]
    %v57 = vld [vmem:[#allocation2 + $0x8] sm:$0xf]
    %v58 = vld [vmem:[#allocation2 + $0xc] sm:$0xf]
    %v59 = vld [vmem:[#allocation2 + $0x10] sm:$0xf]
    %v60 = vld [vmem:[#allocation2 + $0x14] sm:$0xf]
    %v61 = vld [vmem:[#allocation2 + $0x18] sm:$0xf]
    %v62 = vld [vmem:[#allocation2 + $0x1c] sm:$0xf]
    %v63 = vld [vmem:[#allocation2 + $0x20] sm:$0xf]
    %v64 = vld [vmem:[#allocation2 + $0x24] sm:$0xf]
    %v65 = vld [vmem:[#allocation2 + $0x28] sm:$0xf]
    %v66 = vld [vmem:[#allocation2 + $0x2c] sm:$0xf]
    %v67 = vld [vmem:[#allocation2 + $0x30] sm:$0xf]
    %v68 = vld [vmem:[#allocation2 + $0x34] sm:$0xf]
    %v69 = vld [vmem:[#allocation2 + $0x38] sm:$0xf]
    %v70 = vld [vmem:[#allocation2 + $0x3c] sm:$0xf]
    %v71 = vld [vmem:[#allocation2 + $0x40] sm:$0xf]
    %v72 = vld [vmem:[#allocation2 + $0x44] sm:$0xf]
    %v73 = vld [vmem:[#allocation2 + $0x48] sm:$0xf]
    %v74 = vld [vmem:[#allocation2 + $0x4c] sm:$0xf]
    %v75 = vld [vmem:[#allocation2 + $0x50] sm:$0xf]
    %v76 = vld [vmem:[#allocation2 + $0x54] sm:$0xf]
    %v77 = vld [vmem:[#allocation2 + $0x58] sm:$0xf]
    %v78 = vld [vmem:[#allocation2 + $0x5c] sm:$0xf]
    %v79 = vld [vmem:[#allocation2 + $0x60] sm:$0xf]
    %v80 = vld [vmem:[#allocation2 + $0x64] sm:$0xf]
    %v81 = vld [vmem:[#allocation2 + $0x68] sm:$0xf]
    %v82 = vld [vmem:[#allocation2 + $0x6c] sm:$0xf]
    %v83 = vld [vmem:[#allocation2 + $0x70] sm:$0xf]
    %v84 = vld [vmem:[#allocation2 + $0x74] sm:$0xf]
    %v85 = vld [vmem:[#allocation2 + $0x78] sm:$0xf]
    %v86 = vld [vmem:[#allocation2 + $0x7c] sm:$0xf]
    %v87 = vld [vmem:[#allocation2 + $0x80] sm:$0xf]
    %v88 = vld [vmem:[#allocation2 + $0x84] sm:$0xf]
    %v89 = vld [vmem:[#allocation2 + $0x88] sm:$0xf]
    %v90 = vld [vmem:[#allocation2 + $0x8c] sm:$0xf]
    %v91 = vld [vmem:[#allocation2 + $0x90] sm:$0xf]
    %v92 = vld [vmem:[#allocation2 + $0x94] sm:$0xf]
    %v93 = vld [vmem:[#allocation2 + $0x98] sm:$0xf]
    %v94 = vld [vmem:[#allocation2 + $0x9c] sm:$0xf]
    %v95 = vld [vmem:[#allocation2 + $0xa0] sm:$0xf]
    %v96 = vld [vmem:[#allocation2 + $0xa4] sm:$0xf]
    %v97 = vld [vmem:[#allocation2 + $0xa8] sm:$0xf]
    %v98 = vld [vmem:[#allocation2 + $0xac] sm:$0xf]
    %v99 = vld [vmem:[#allocation2 + $0xb0] sm:$0xf]
    %v100 = vld [vmem:[#allocation2 + $0xb4] sm:$0xf]
    %v101 = vld [vmem:[#allocation2 + $0xb8] sm:$0xf]
    %v102 = vld [vmem:[#allocation2 + $0xbc] sm:$0xf]
    %v103 = vld [vmem:[#allocation2 + $0xc0] sm:$0xf]
    %v104 = vld [vmem:[#allocation2 + $0xc4] sm:$0xf]
    %v105 = vld [vmem:[#allocation2 + $0xc8] sm:$0xf]
    %v106 = vld [vmem:[#allocation2 + $0xcc] sm:$0xf]
    %v107 = vld [vmem:[#allocation2 + $0xd0] sm:$0xf]
    %v108 = vld [vmem:[#allocation2 + $0xd4] sm:$0xf]
    %v109 = vld [vmem:[#allocation2 + $0xd8] sm:$0xf]
    %v110 = vld [vmem:[#allocation2 + $0xdc] sm:$0xf]
    %v111 = vld [vmem:[#allocation2 + $0xe0] sm:$0xf]
    %v112 = vld [vmem:[#allocation2 + $0xe4] sm:$0xf]
    %v113 = vld [vmem:[#allocation2 + $0xe8] sm:$0xf]
    %v114 = vld [vmem:[#allocation2 + $0xec] sm:$0xf]
    %v115 = vld [vmem:[#allocation2 + $0xf0] sm:$0xf]
    %v116 = vld [vmem:[#allocation2 + $0xf4] sm:$0xf]
    %v117 = vld [vmem:[#allocation2 + $0xf8] sm:$0xf]
    %v118 = vld [vmem:[#allocation2 + $0xfc] sm:$0xf]
    %v119 = vld [vmem:[#allocation2 + $0x100] sm:$0xf]
    %v120 = vld [vmem:[#allocation2 + $0x104] sm:$0xf]
    %v121 = vld [vmem:[#allocation2 + $0x108] sm:$0xf]
    %v122 = vld [vmem:[#allocation2 + $0x10c] sm:$0xf]
    %v123 = vld [vmem:[#allocation2 + $0x110] sm:$0xf]
    %v124 = vld [vmem:[#allocation2 + $0x114] sm:$0xf]
    %v125 = vld [vmem:[#allocation2 + $0x118] sm:$0xf]
    %v126 = vld [vmem:[#allocation2 + $0x11c] sm:$0xf]
    %v127 = vld [vmem:[#allocation2 + $0x120] sm:$0xf]
    %v128 = vld [vmem:[#allocation2 + $0x124] sm:$0xf]
    %v129 = vld [vmem:[#allocation2 + $0x128] sm:$0xf]
    %v130 = vld [vmem:[#allocation2 + $0x12c] sm:$0xf]
    %v131 = vld [vmem:[#allocation2 + $0x130] sm:$0xf]
    %v132 = vld [vmem:[#allocation2 + $0x134] sm:$0xf]
    %v133 = vld [vmem:[#allocation2 + $0x138] sm:$0xf]
    %v134 = vld [vmem:[#allocation2 + $0x13c] sm:$0xf]
    %v135 = vld [vmem:[#allocation2 + $0x140] sm:$0xf]
    %v136 = vld [vmem:[#allocation2 + $0x144] sm:$0xf]
    %v137 = vld [vmem:[#allocation2 + $0x148] sm:$0xf]
    %v138 = vld [vmem:[#allocation2 + $0x14c] sm:$0xf]
    %v139 = vld [vmem:[#allocation2 + $0x150] sm:$0xf]
    %v140 = vld [vmem:[#allocation2 + $0x154] sm:$0xf]
    %v141 = vld [vmem:[#allocation2 + $0x158] sm:$0xf]
    %v142 = vld [vmem:[#allocation2 + $0x15c] sm:$0xf]
    %v143 = vld [vmem:[#allocation2 + $0x160] sm:$0xf]
    %v144 = vld [vmem:[#allocation2 + $0x164] sm:$0xf]
    %v145 = vld [vmem:[#allocation2 + $0x168] sm:$0xf]
    %v146 = vld [vmem:[#allocation2 + $0x16c] sm:$0xf]
    %v147 = vld [vmem:[#allocation2 + $0x170] sm:$0xf]
    %v148 = vld [vmem:[#allocation2 + $0x174] sm:$0xf]
    %v149 = vld [vmem:[#allocation2 + $0x178] sm:$0xf]
    %v150 = vld [vmem:[#allocation2 + $0x17c] sm:$0xf]
    %v151 = vld [vmem:[#allocation2 + $0x180] sm:$0xf]
    %v152 = vld [vmem:[#allocation2 + $0x184] sm:$0xf]
    %v153 = vld [vmem:[#allocation2 + $0x188] sm:$0xf]
    %v154 = vld [vmem:[#allocation2 + $0x18c] sm:$0xf]
    %v155 = vld [vmem:[#allocation2 + $0x190] sm:$0xf]
    %v156 = vld [vmem:[#allocation2 + $0x194] sm:$0xf]
    %v157 = vld [vmem:[#allocation2 + $0x198] sm:$0xf]
    %v158 = vld [vmem:[#allocation2 + $0x19c] sm:$0xf]
    %v159 = vld [vmem:[#allocation2 + $0x1a0] sm:$0xf]
    %v160 = vld [vmem:[#allocation2 + $0x1a4] sm:$0xf]
    %v161 = vld [vmem:[#allocation2 + $0x1a8] sm:$0xf]
    %v162 = vld [vmem:[#allocation2 + $0x1ac] sm:$0xf]
    %v163 = vld [vmem:[#allocation2 + $0x1b0] sm:$0xf]
    %v164 = vld [vmem:[#allocation2 + $0x1b4] sm:$0xf]
    %v165 = vld [vmem:[#allocation2 + $0x1b8] sm:$0xf]
    %v166 = vld [vmem:[#allocation2 + $0x1bc] sm:$0xf]
    %v167 = vld [vmem:[#allocation2 + $0x1c0] sm:$0xf]
    %v168 = vld [vmem:[#allocation2 + $0x1c4] sm:$0xf]
    %v169 = vld [vmem:[#allocation2 + $0x1c8] sm:$0xf]
    %v170 = vld [vmem:[#allocation2 + $0x1cc] sm:$0xf]
    %v171 = vld [vmem:[#allocation2 + $0x1d0] sm:$0xf]
    %v172 = vld [vmem:[#allocation2 + $0x1d4] sm:$0xf]
    %v173 = vld [vmem:[#allocation2 + $0x1d8] sm:$0xf]
    %v174 = vld [vmem:[#allocation2 + $0x1dc] sm:$0xf]
    %v175 = vld [vmem:[#allocation2 + $0x1e0] sm:$0xf]
    %v176 = vld [vmem:[#allocation2 + $0x1e4] sm:$0xf]
    %v177 = vld [vmem:[#allocation2 + $0x1e8] sm:$0xf]
    %v178 = vld [vmem:[#allocation2 + $0x1ec] sm:$0xf]
    %v179 = vld [vmem:[#allocation2 + $0x1f0] sm:$0xf]
    %v180 = vld [vmem:[#allocation2 + $0x1f4] sm:$0xf]
    %v181 = vld [vmem:[#allocation2 + $0x1f8] sm:$0xf]
    %v182 = vld [vmem:[#allocation2 + $0x1fc] sm:$0xf]
    %v183 = vld [vmem:[%s2] sm:$0x1]
    %v184 = vpack.c.bf16 %v47, %v47
    %v185 = vpack.c.bf16 %v48, %v48
    %v186 = vpack.c.bf16 %v49, %v49
    %v187 = vpack.c.bf16 %v50, %v50
    %v188 = vpack.c.bf16 %v51, %v51
    %v189 = vpack.c.bf16 %v52, %v52
    %v190 = vpack.c.bf16 %v53, %v53
    %v191 = vpack.c.bf16 %v54, %v54
    %v193 = vlaneseq
    %v194 = vshrl.u32 %v193, 7
    %v195 = vsub.s32 0, %v194
    %v196 = vrot.slane %v183, %v195
    %v326 = vunpack.c.l.b16 %v55
    %v327 = vunpack.c.l.b16 %v56
    %v328 = vunpack.c.l.b16 %v57
    %v329 = vunpack.c.l.b16 %v58
    %v330 = vunpack.c.l.b16 %v59
    %v331 = vunpack.c.l.b16 %v60
    %v332 = vunpack.c.l.b16 %v61
    %v333 = vunpack.c.l.b16 %v62
    %v334 = vunpack.c.l.b16 %v63
    %v335 = vunpack.c.l.b16 %v64
    %v336 = vunpack.c.l.b16 %v65
    %v337 = vunpack.c.l.b16 %v66
    %v338 = vunpack.c.l.b16 %v67
    %v339 = vunpack.c.l.b16 %v68
    %v340 = vunpack.c.l.b16 %v69
    %v341 = vunpack.c.l.b16 %v70
    %v342 = vunpack.c.l.b16 %v71
    %v343 = vunpack.c.l.b16 %v72
    %v344 = vunpack.c.l.b16 %v73
    %v345 = vunpack.c.l.b16 %v74
    %v346 = vunpack.c.l.b16 %v75
    %v347 = vunpack.c.l.b16 %v76
    %v348 = vunpack.c.l.b16 %v77
    %v349 = vunpack.c.l.b16 %v78
    %v350 = vunpack.c.l.b16 %v79
    %v351 = vunpack.c.l.b16 %v80
    %v352 = vunpack.c.l.b16 %v81
    %v353 = vunpack.c.l.b16 %v82
    %v354 = vunpack.c.l.b16 %v83
    %v355 = vunpack.c.l.b16 %v84
    %v356 = vunpack.c.l.b16 %v85
    %v357 = vunpack.c.l.b16 %v86
    %v358 = vunpack.c.l.b16 %v87
    %v359 = vunpack.c.l.b16 %v88
    %v360 = vunpack.c.l.b16 %v89
    %v361 = vunpack.c.l.b16 %v90
    %v362 = vunpack.c.l.b16 %v91
    %v363 = vunpack.c.l.b16 %v92
    %v364 = vunpack.c.l.b16 %v93
    %v365 = vunpack.c.l.b16 %v94
    %v366 = vunpack.c.l.b16 %v95
    %v367 = vunpack.c.l.b16 %v96
    %v368 = vunpack.c.l.b16 %v97
    %v369 = vunpack.c.l.b16 %v98
    %v370 = vunpack.c.l.b16 %v99
    %v371 = vunpack.c.l.b16 %v100
    %v372 = vunpack.c.l.b16 %v101
    %v373 = vunpack.c.l.b16 %v102
    %v374 = vunpack.c.l.b16 %v103
    %v375 = vunpack.c.l.b16 %v104
    %v376 = vunpack.c.l.b16 %v105
    %v377 = vunpack.c.l.b16 %v106
    %v378 = vunpack.c.l.b16 %v107
    %v379 = vunpack.c.l.b16 %v108
    %v380 = vunpack.c.l.b16 %v109
    %v381 = vunpack.c.l.b16 %v110
    %v382 = vunpack.c.l.b16 %v111
    %v383 = vunpack.c.l.b16 %v112
    %v384 = vunpack.c.l.b16 %v113
    %v385 = vunpack.c.l.b16 %v114
    %v386 = vunpack.c.l.b16 %v115
    %v387 = vunpack.c.l.b16 %v116
    %v388 = vunpack.c.l.b16 %v117
    %v389 = vunpack.c.l.b16 %v118
    %v390 = vunpack.c.l.b16 %v119
    %v391 = vunpack.c.l.b16 %v120
    %v392 = vunpack.c.l.b16 %v121
    %v393 = vunpack.c.l.b16 %v122
    %v394 = vunpack.c.l.b16 %v123
    %v395 = vunpack.c.l.b16 %v124
    %v396 = vunpack.c.l.b16 %v125
    %v397 = vunpack.c.l.b16 %v126
    %v398 = vunpack.c.l.b16 %v127
    %v399 = vunpack.c.l.b16 %v128
    %v400 = vunpack.c.l.b16 %v129
    %v401 = vunpack.c.l.b16 %v130
    %v402 = vunpack.c.l.b16 %v131
    %v403 = vunpack.c.l.b16 %v132
    %v404 = vunpack.c.l.b16 %v133
    %v405 = vunpack.c.l.b16 %v134
    %v406 = vunpack.c.l.b16 %v135
    %v407 = vunpack.c.l.b16 %v136
    %v408 = vunpack.c.l.b16 %v137
    %v409 = vunpack.c.l.b16 %v138
    %v410 = vunpack.c.l.b16 %v139
    %v411 = vunpack.c.l.b16 %v140
    %v412 = vunpack.c.l.b16 %v141
    %v413 = vunpack.c.l.b16 %v142
    %v414 = vunpack.c.l.b16 %v143
    %v415 = vunpack.c.l.b16 %v144
    %v416 = vunpack.c.l.b16 %v145
    %v417 = vunpack.c.l.b16 %v146
    %v418 = vunpack.c.l.b16 %v147
    %v419 = vunpack.c.l.b16 %v148
    %v420 = vunpack.c.l.b16 %v149
    %v421 = vunpack.c.l.b16 %v150
    %v422 = vunpack.c.l.b16 %v151
    %v423 = vunpack.c.l.b16 %v152
    %v424 = vunpack.c.l.b16 %v153
    %v425 = vunpack.c.l.b16 %v154
    %v426 = vunpack.c.l.b16 %v155
    %v427 = vunpack.c.l.b16 %v156
    %v428 = vunpack.c.l.b16 %v157
    %v429 = vunpack.c.l.b16 %v158
    %v430 = vunpack.c.l.b16 %v159
    %v431 = vunpack.c.l.b16 %v160
    %v432 = vunpack.c.l.b16 %v161
    %v433 = vunpack.c.l.b16 %v162
    %v434 = vunpack.c.l.b16 %v163
    %v435 = vunpack.c.l.b16 %v164
    %v436 = vunpack.c.l.b16 %v165
    %v437 = vunpack.c.l.b16 %v166
    %v438 = vunpack.c.l.b16 %v167
    %v439 = vunpack.c.l.b16 %v168
    %v440 = vunpack.c.l.b16 %v169
    %v441 = vunpack.c.l.b16 %v170
    %v442 = vunpack.c.l.b16 %v171
    %v443 = vunpack.c.l.b16 %v172
    %v444 = vunpack.c.l.b16 %v173
    %v445 = vunpack.c.l.b16 %v174
    %v446 = vunpack.c.l.b16 %v175
    %v447 = vunpack.c.l.b16 %v176
    %v448 = vunpack.c.l.b16 %v177
    %v449 = vunpack.c.l.b16 %v178
    %v450 = vunpack.c.l.b16 %v179
    %v451 = vunpack.c.l.b16 %v180
    %v452 = vunpack.c.l.b16 %v181
    %v453 = vunpack.c.l.b16 %v182
    %v454 = vpack.c.b16 %v327, %v326
    %v455 = vpack.c.b16 %v329, %v328
    %v456 = vpack.c.b16 %v331, %v330
    %v457 = vpack.c.b16 %v333, %v332
    %v458 = vpack.c.b16 %v335, %v334
    %v459 = vpack.c.b16 %v337, %v336
    %v460 = vpack.c.b16 %v339, %v338
    %v461 = vpack.c.b16 %v341, %v340
    %v462 = vpack.c.b16 %v343, %v342
    %v463 = vpack.c.b16 %v345, %v344
    %v464 = vpack.c.b16 %v347, %v346
    %v465 = vpack.c.b16 %v349, %v348
    %v466 = vpack.c.b16 %v351, %v350
    %v467 = vpack.c.b16 %v353, %v352
    %v468 = vpack.c.b16 %v355, %v354
    %v469 = vpack.c.b16 %v357, %v356
    %v470 = vpack.c.b16 %v359, %v358
    %v471 = vpack.c.b16 %v361, %v360
    %v472 = vpack.c.b16 %v363, %v362
    %v473 = vpack.c.b16 %v365, %v364
    %v474 = vpack.c.b16 %v367, %v366
    %v475 = vpack.c.b16 %v369, %v368
    %v476 = vpack.c.b16 %v371, %v370
    %v477 = vpack.c.b16 %v373, %v372
    %v478 = vpack.c.b16 %v375, %v374
    %v479 = vpack.c.b16 %v377, %v376
    %v480 = vpack.c.b16 %v379, %v378
    %v481 = vpack.c.b16 %v381, %v380
    %v482 = vpack.c.b16 %v383, %v382
    %v483 = vpack.c.b16 %v385, %v384
    %v484 = vpack.c.b16 %v387, %v386
    %v485 = vpack.c.b16 %v389, %v388
    %v486 = vpack.c.b16 %v391, %v390
    %v487 = vpack.c.b16 %v393, %v392
    %v488 = vpack.c.b16 %v395, %v394
    %v489 = vpack.c.b16 %v397, %v396
    %v490 = vpack.c.b16 %v399, %v398
    %v491 = vpack.c.b16 %v401, %v400
    %v492 = vpack.c.b16 %v403, %v402
    %v493 = vpack.c.b16 %v405, %v404
    %v494 = vpack.c.b16 %v407, %v406
    %v495 = vpack.c.b16 %v409, %v408
    %v496 = vpack.c.b16 %v411, %v410
    %v497 = vpack.c.b16 %v413, %v412
    %v498 = vpack.c.b16 %v415, %v414
    %v499 = vpack.c.b16 %v417, %v416
    %v500 = vpack.c.b16 %v419, %v418
    %v501 = vpack.c.b16 %v421, %v420
    %v502 = vpack.c.b16 %v423, %v422
    %v503 = vpack.c.b16 %v425, %v424
    %v504 = vpack.c.b16 %v427, %v426
    %v505 = vpack.c.b16 %v429, %v428
    %v506 = vpack.c.b16 %v431, %v430
    %v507 = vpack.c.b16 %v433, %v432
    %v508 = vpack.c.b16 %v435, %v434
    %v509 = vpack.c.b16 %v437, %v436
    %v510 = vpack.c.b16 %v439, %v438
    %v511 = vpack.c.b16 %v441, %v440
    %v512 = vpack.c.b16 %v443, %v442
    %v513 = vpack.c.b16 %v445, %v444
    %v514 = vpack.c.b16 %v447, %v446
    %v515 = vpack.c.b16 %v449, %v448
    %v516 = vpack.c.b16 %v451, %v450
    %v517 = vpack.c.b16 %v453, %v452
    %582 = vmatprep.subr.bf16.mxu0 0
    %583 = vmatpush1.bf16.msra.mxu0 %v454
    %584 = vmatprep.subr.bf16.mxu0 0
    %585 = vmatpush1.bf16.msra.mxu0 %v455
    %586 = vmatprep.subr.bf16.mxu0 0
    %587 = vmatpush1.bf16.msra.mxu0 %v456
    %588 = vmatprep.subr.bf16.mxu0 0
    %589 = vmatpush1.bf16.msra.mxu0 %v457
    %590 = vmatprep.subr.bf16.mxu0 0
    %591 = vmatpush1.bf16.msra.mxu0 %v458
    %592 = vmatprep.subr.bf16.mxu0 0
    %593 = vmatpush1.bf16.msra.mxu0 %v459
    %594 = vmatprep.subr.bf16.mxu0 0
    %595 = vmatpush1.bf16.msra.mxu0 %v460
    %596 = vmatprep.subr.bf16.mxu0 0
    %597 = vmatpush1.bf16.msra.mxu0 %v461
    %598 = vmatprep.subr.bf16.mxu0 0
    %599 = vmatpush1.bf16.msra.mxu0 %v462
    %600 = vmatprep.subr.bf16.mxu0 0
    %601 = vmatpush1.bf16.msra.mxu0 %v463
    %602 = vmatprep.subr.bf16.mxu0 0
    %603 = vmatpush1.bf16.msra.mxu0 %v464
    %604 = vmatprep.subr.bf16.mxu0 0
    %605 = vmatpush1.bf16.msra.mxu0 %v465
    %606 = vmatprep.subr.bf16.mxu0 0
    %607 = vmatpush1.bf16.msra.mxu0 %v466
    %608 = vmatprep.subr.bf16.mxu0 0
    %609 = vmatpush1.bf16.msra.mxu0 %v467
    %610 = vmatprep.subr.bf16.mxu0 0
    %611 = vmatpush1.bf16.msra.mxu0 %v468
    %612 = vmatprep.subr.bf16.mxu0 0
    %613 = vmatpush1.bf16.msra.mxu0 %v469
    %614 = vmatprep.mubr.bf16.mxu0 %v185
    %615 = vmatmul.mubr.bf16.gmra.mrb[0].mxu0 %v184
    %v616 = vpop.f32.mrb[0].mxu0
    %v617 = vadd.f32 %v196, %v616
    %v618 = vpop.f32.mrb[0].mxu0
    %v619 = vpop.f32.mrb[0].mxu0
    %v620 = vpop.f32.mrb[0].mxu0
    %621 = vdwg.mxu0
    %622 = vmatprep.subr.bf16.mxu0 0
    %623 = vmatpush1.bf16.msra.mxu0 %v470
    %624 = vmatprep.subr.bf16.mxu0 0
    %625 = vmatpush1.bf16.msra.mxu0 %v471
    %626 = vmatprep.subr.bf16.mxu0 0
    %627 = vmatpush1.bf16.msra.mxu0 %v472
    %628 = vmatprep.subr.bf16.mxu0 0
    %629 = vmatpush1.bf16.msra.mxu0 %v473
    %630 = vmatprep.subr.bf16.mxu0 0
    %631 = vmatpush1.bf16.msra.mxu0 %v474
    %632 = vmatprep.subr.bf16.mxu0 0
    %633 = vmatpush1.bf16.msra.mxu0 %v475
    %634 = vmatprep.subr.bf16.mxu0 0
    %635 = vmatpush1.bf16.msra.mxu0 %v476
    %636 = vmatprep.subr.bf16.mxu0 0
    %637 = vmatpush1.bf16.msra.mxu0 %v477
    %638 = vmatprep.subr.bf16.mxu0 0
    %639 = vmatpush1.bf16.msra.mxu0 %v478
    %640 = vmatprep.subr.bf16.mxu0 0
    %641 = vmatpush1.bf16.msra.mxu0 %v479
    %642 = vmatprep.subr.bf16.mxu0 0
    %643 = vmatpush1.bf16.msra.mxu0 %v480
    %644 = vmatprep.subr.bf16.mxu0 0
    %645 = vmatpush1.bf16.msra.mxu0 %v481
    %646 = vmatprep.subr.bf16.mxu0 0
    %647 = vmatpush1.bf16.msra.mxu0 %v482
    %648 = vmatprep.subr.bf16.mxu0 0
    %649 = vmatpush1.bf16.msra.mxu0 %v483
    %650 = vmatprep.subr.bf16.mxu0 0
    %651 = vmatpush1.bf16.msra.mxu0 %v484
    %652 = vmatprep.subr.bf16.mxu0 0
    %653 = vmatpush1.bf16.msra.mxu0 %v485
    %654 = vmatprep.mubr.bf16.mxu0 %v187
    %655 = vmatmul.mubr.bf16.gmra.mrb[0].mxu0 %v186
    %v656 = vpop.f32.mrb[0].mxu0
    %v657 = vadd.f32 %v617, %v656
    %v658 = vpop.f32.mrb[0].mxu0
    %v659 = vpop.f32.mrb[0].mxu0
    %v660 = vpop.f32.mrb[0].mxu0
    %661 = vdwg.mxu0
    %662 = vmatprep.subr.bf16.mxu0 0
    %663 = vmatpush1.bf16.msra.mxu0 %v486
    %664 = vmatprep.subr.bf16.mxu0 0
    %665 = vmatpush1.bf16.msra.mxu0 %v487
    %666 = vmatprep.subr.bf16.mxu0 0
    %667 = vmatpush1.bf16.msra.mxu0 %v488
    %668 = vmatprep.subr.bf16.mxu0 0
    %669 = vmatpush1.bf16.msra.mxu0 %v489
    %670 = vmatprep.subr.bf16.mxu0 0
    %671 = vmatpush1.bf16.msra.mxu0 %v490
    %672 = vmatprep.subr.bf16.mxu0 0
    %673 = vmatpush1.bf16.msra.mxu0 %v491
    %674 = vmatprep.subr.bf16.mxu0 0
    %675 = vmatpush1.bf16.msra.mxu0 %v492
    %676 = vmatprep.subr.bf16.mxu0 0
    %677 = vmatpush1.bf16.msra.mxu0 %v493
    %678 = vmatprep.subr.bf16.mxu0 0
    %679 = vmatpush1.bf16.msra.mxu0 %v494
    %680 = vmatprep.subr.bf16.mxu0 0
    %681 = vmatpush1.bf16.msra.mxu0 %v495
    %682 = vmatprep.subr.bf16.mxu0 0
    %683 = vmatpush1.bf16.msra.mxu0 %v496
    %684 = vmatprep.subr.bf16.mxu0 0
    %685 = vmatpush1.bf16.msra.mxu0 %v497
    %686 = vmatprep.subr.bf16.mxu0 0
    %687 = vmatpush1.bf16.msra.mxu0 %v498
    %688 = vmatprep.subr.bf16.mxu0 0
    %689 = vmatpush1.bf16.msra.mxu0 %v499
    %690 = vmatprep.subr.bf16.mxu0 0
    %691 = vmatpush1.bf16.msra.mxu0 %v500
    %692 = vmatprep.subr.bf16.mxu0 0
    %693 = vmatpush1.bf16.msra.mxu0 %v501
    %694 = vmatprep.mubr.bf16.mxu0 %v189
    %695 = vmatmul.mubr.bf16.gmra.mrb[0].mxu0 %v188
    %v696 = vpop.f32.mrb[0].mxu0
    %v697 = vadd.f32 %v657, %v696
    %v698 = vpop.f32.mrb[0].mxu0
    %v699 = vpop.f32.mrb[0].mxu0
    %v700 = vpop.f32.mrb[0].mxu0
    %701 = vdwg.mxu0
    %702 = vmatprep.subr.bf16.mxu0 0
    %703 = vmatpush1.bf16.msra.mxu0 %v502
    %704 = vmatprep.subr.bf16.mxu0 0
    %705 = vmatpush1.bf16.msra.mxu0 %v503
    %706 = vmatprep.subr.bf16.mxu0 0
    %707 = vmatpush1.bf16.msra.mxu0 %v504
    %708 = vmatprep.subr.bf16.mxu0 0
    %709 = vmatpush1.bf16.msra.mxu0 %v505
    %710 = vmatprep.subr.bf16.mxu0 0
    %711 = vmatpush1.bf16.msra.mxu0 %v506
    %712 = vmatprep.subr.bf16.mxu0 0
    %713 = vmatpush1.bf16.msra.mxu0 %v507
    %714 = vmatprep.subr.bf16.mxu0 0
    %715 = vmatpush1.bf16.msra.mxu0 %v508
    %716 = vmatprep.subr.bf16.mxu0 0
    %717 = vmatpush1.bf16.msra.mxu0 %v509
    %718 = vmatprep.subr.bf16.mxu0 0
    %719 = vmatpush1.bf16.msra.mxu0 %v510
    %720 = vmatprep.subr.bf16.mxu0 0
    %721 = vmatpush1.bf16.msra.mxu0 %v511
    %722 = vmatprep.subr.bf16.mxu0 0
    %723 = vmatpush1.bf16.msra.mxu0 %v512
    %724 = vmatprep.subr.bf16.mxu0 0
    %725 = vmatpush1.bf16.msra.mxu0 %v513
    %726 = vmatprep.subr.bf16.mxu0 0
    %727 = vmatpush1.bf16.msra.mxu0 %v514
    %728 = vmatprep.subr.bf16.mxu0 0
    %729 = vmatpush1.bf16.msra.mxu0 %v515
    %730 = vmatprep.subr.bf16.mxu0 0
    %731 = vmatpush1.bf16.msra.mxu0 %v516
    %732 = vmatprep.subr.bf16.mxu0 0
    %733 = vmatpush1.bf16.msra.mxu0 %v517
    %734 = vmatprep.mubr.bf16.mxu0 %v191
    %735 = vmatmul.mubr.bf16.gmra.mrb[0].mxu0 %v190
    %v736 = vpop.f32.mrb[0].mxu0
    %v737 = vadd.f32 %v697, %v736
    %v738 = vpop.f32.mrb[0].mxu0
    %v739 = vpop.f32.mrb[0].mxu0
    %v740 = vpop.f32.mrb[0].mxu0
    %741 = vdwg.mxu0
    %v742 = vmax.f32 %v737, 0.0
    %v743 = vld [vmem:[%s3] sm:$0xf]
    %v744 = vld [vmem:[%s3 + $0x4] sm:$0xf]
    %v745 = vld [vmem:[%s3 + $0x8] sm:$0xf]
    %v746 = vld [vmem:[%s3 + $0xc] sm:$0xf]
    %v747 = vld [vmem:[%s3 + $0x10] sm:$0xf]
    %v748 = vld [vmem:[%s3 + $0x14] sm:$0xf]
    %v749 = vld [vmem:[%s3 + $0x18] sm:$0xf]
    %v750 = vld [vmem:[%s3 + $0x1c] sm:$0xf]
    %v751 = vld [vmem:[%s3 + $0x20] sm:$0xf]
    %v752 = vld [vmem:[%s3 + $0x24] sm:$0xf]
    %v753 = vld [vmem:[%s3 + $0x28] sm:$0xf]
    %v754 = vld [vmem:[%s3 + $0x2c] sm:$0xf]
    %v755 = vld [vmem:[%s3 + $0x30] sm:$0xf]
    %v756 = vld [vmem:[%s3 + $0x34] sm:$0xf]
    %v757 = vld [vmem:[%s3 + $0x38] sm:$0xf]
    %v758 = vld [vmem:[%s3 + $0x3c] sm:$0xf]
    %v759 = vld [vmem:[%s4] sm:$0x1]
    %v760 = vpack.c.bf16 %v742, %v742
    %v762 = vlaneseq
    %v763 = vshrl.u32 %v762, 7
    %v764 = vsub.s32 0, %v763
    %v765 = vrot.slane %v759, %v764
    %v783 = vunpack.c.l.b16 %v743
    %v784 = vunpack.c.l.b16 %v744
    %v785 = vunpack.c.l.b16 %v745
    %v786 = vunpack.c.l.b16 %v746
    %v787 = vunpack.c.l.b16 %v747
    %v788 = vunpack.c.l.b16 %v748
    %v789 = vunpack.c.l.b16 %v749
    %v790 = vunpack.c.l.b16 %v750
    %v791 = vunpack.c.l.b16 %v751
    %v792 = vunpack.c.l.b16 %v752
    %v793 = vunpack.c.l.b16 %v753
    %v794 = vunpack.c.l.b16 %v754
    %v795 = vunpack.c.l.b16 %v755
    %v796 = vunpack.c.l.b16 %v756
    %v797 = vunpack.c.l.b16 %v757
    %v798 = vunpack.c.l.b16 %v758
    %v799 = vpack.c.b16 %v784, %v783
    %v800 = vpack.c.b16 %v786, %v785
    %v801 = vpack.c.b16 %v788, %v787
    %v802 = vpack.c.b16 %v790, %v789
    %v803 = vpack.c.b16 %v792, %v791
    %v804 = vpack.c.b16 %v794, %v793
    %v805 = vpack.c.b16 %v796, %v795
    %v806 = vpack.c.b16 %v798, %v797
    %815 = vmatprep.subr.bf16.mxu0 0
    %816 = vmatpush1.bf16.msra.mxu0 %v799
    %817 = vmatprep.subr.bf16.mxu0 0
    %818 = vmatpush1.bf16.msra.mxu0 %v800
    %819 = vmatprep.subr.bf16.mxu0 0
    %820 = vmatpush1.bf16.msra.mxu0 %v801
    %821 = vmatprep.subr.bf16.mxu0 0
    %822 = vmatpush1.bf16.msra.mxu0 %v802
    %823 = vmatprep.subr.bf16.mxu0 0
    %824 = vmatpush1.bf16.msra.mxu0 %v803
    %825 = vmatprep.subr.bf16.mxu0 0
    %826 = vmatpush1.bf16.msra.mxu0 %v804
    %827 = vmatprep.subr.bf16.mxu0 0
    %828 = vmatpush1.bf16.msra.mxu0 %v805
    %829 = vmatprep.subr.bf16.mxu0 0
    %830 = vmatpush1.bf16.msra.mxu0 %v806
    %831 = vmatprep.subr.bf16.mxu0 0
    %832 = vmatpush1.bf16.msra.mxu0 0
    %833 = vmatprep.subr.bf16.mxu0 0
    %834 = vmatpush1.bf16.msra.mxu0 0
    %835 = vmatprep.subr.bf16.mxu0 0
    %836 = vmatpush1.bf16.msra.mxu0 0
    %837 = vmatprep.subr.bf16.mxu0 0
    %838 = vmatpush1.bf16.msra.mxu0 0
    %839 = vmatprep.subr.bf16.mxu0 0
    %840 = vmatpush1.bf16.msra.mxu0 0
    %841 = vmatprep.subr.bf16.mxu0 0
    %842 = vmatpush1.bf16.msra.mxu0 0
    %843 = vmatprep.subr.bf16.mxu0 0
    %844 = vmatpush1.bf16.msra.mxu0 0
    %845 = vmatprep.subr.bf16.mxu0 0
    %846 = vmatpush1.bf16.msra.mxu0 0
    %847 = vmatprep.mubr.bf16.mxu0 0
    %848 = vmatmul.mubr.bf16.gmra.mrb[0].mxu0 %v760
    %v849 = vpop.f32.mrb[0].mxu0
    %v850 = vadd.f32 %v765, %v849
    %v851 = vpop.f32.mrb[0].mxu0
    %v852 = vpop.f32.mrb[0].mxu0
    %v853 = vpop.f32.mrb[0].mxu0
    %854 = vdwg.mxu0
    %v855 = vmax.f32 %v850, 0.0
    %v856 = vld [vmem:[%s5] sm:$0xf]
    %v857 = vld [vmem:[%s5 + $0x4] sm:$0xf]
    %v858 = vld [vmem:[%s5 + $0x8] sm:$0xf]
    %v859 = vld [vmem:[%s5 + $0xc] sm:$0xf]
    %v860 = vld [vmem:[%s5 + $0x10] sm:$0xf]
    %v861 = vld [vmem:[%s5 + $0x14] sm:$0xf]
    %v862 = vld [vmem:[%s5 + $0x18] sm:$0xf]
    %v863 = vld [vmem:[%s5 + $0x1c] sm:$0xf]
    %v864 = vld [vmem:[%s5 + $0x20] sm:$0xf]
    %v865 = vld [vmem:[%s5 + $0x24] sm:$0xf]
    %v866 = vld [vmem:[%s5 + $0x28] sm:$0xf]
    %v867 = vld [vmem:[%s5 + $0x2c] sm:$0xf]
    %v868 = vld [vmem:[%s5 + $0x30] sm:$0xf]
    %v869 = vld [vmem:[%s5 + $0x34] sm:$0xf]
    %v870 = vld [vmem:[%s5 + $0x38] sm:$0xf]
    %v871 = vld [vmem:[%s5 + $0x3c] sm:$0xf]
    %v872 = vld [vmem:[%s6] sm:$0x1]
    %v873 = vpack.c.bf16 %v855, %v855
    %v875 = vlaneseq
    %v876 = vshrl.u32 %v875, 7
    %v877 = vsub.s32 0, %v876
    %v878 = vrot.slane %v872, %v877
    %v896 = vunpack.c.l.b16 %v856
    %v897 = vunpack.c.l.b16 %v857
    %v898 = vunpack.c.l.b16 %v858
    %v899 = vunpack.c.l.b16 %v859
    %v900 = vunpack.c.l.b16 %v860
    %v901 = vunpack.c.l.b16 %v861
    %v902 = vunpack.c.l.b16 %v862
    %v903 = vunpack.c.l.b16 %v863
    %v904 = vunpack.c.l.b16 %v864
    %v905 = vunpack.c.l.b16 %v865
    %v906 = vunpack.c.l.b16 %v866
    %v907 = vunpack.c.l.b16 %v867
    %v908 = vunpack.c.l.b16 %v868
    %v909 = vunpack.c.l.b16 %v869
    %v910 = vunpack.c.l.b16 %v870
    %v911 = vunpack.c.l.b16 %v871
    %v912 = vpack.c.b16 %v897, %v896
    %v913 = vpack.c.b16 %v899, %v898
    %v914 = vpack.c.b16 %v901, %v900
    %v915 = vpack.c.b16 %v903, %v902
    %v916 = vpack.c.b16 %v905, %v904
    %v917 = vpack.c.b16 %v907, %v906
    %v918 = vpack.c.b16 %v909, %v908
    %v919 = vpack.c.b16 %v911, %v910
    %928 = vmatprep.subr.bf16.mxu0 0
    %929 = vmatpush1.bf16.msra.mxu0 %v912
    %930 = vmatprep.subr.bf16.mxu0 0
    %931 = vmatpush1.bf16.msra.mxu0 %v913
    %932 = vmatprep.subr.bf16.mxu0 0
    %933 = vmatpush1.bf16.msra.mxu0 %v914
    %934 = vmatprep.subr.bf16.mxu0 0
    %935 = vmatpush1.bf16.msra.mxu0 %v915
    %936 = vmatprep.subr.bf16.mxu0 0
    %937 = vmatpush1.bf16.msra.mxu0 %v916
    %938 = vmatprep.subr.bf16.mxu0 0
    %939 = vmatpush1.bf16.msra.mxu0 %v917
    %940 = vmatprep.subr.bf16.mxu0 0
    %941 = vmatpush1.bf16.msra.mxu0 %v918
    %942 = vmatprep.subr.bf16.mxu0 0
    %943 = vmatpush1.bf16.msra.mxu0 %v919
    %944 = vmatprep.subr.bf16.mxu0 0
    %945 = vmatpush1.bf16.msra.mxu0 0
    %946 = vmatprep.subr.bf16.mxu0 0
    %947 = vmatpush1.bf16.msra.mxu0 0
    %948 = vmatprep.subr.bf16.mxu0 0
    %949 = vmatpush1.bf16.msra.mxu0 0
    %950 = vmatprep.subr.bf16.mxu0 0
    %951 = vmatpush1.bf16.msra.mxu0 0
    %952 = vmatprep.subr.bf16.mxu0 0
    %953 = vmatpush1.bf16.msra.mxu0 0
    %954 = vmatprep.subr.bf16.mxu0 0
    %955 = vmatpush1.bf16.msra.mxu0 0
    %956 = vmatprep.subr.bf16.mxu0 0
    %957 = vmatpush1.bf16.msra.mxu0 0
    %958 = vmatprep.subr.bf16.mxu0 0
    %959 = vmatpush1.bf16.msra.mxu0 0
    %960 = vmatprep.mubr.bf16.mxu0 0
    %961 = vmatmul.mubr.bf16.gmra.mrb[0].mxu0 %v873
    %v962 = vpop.f32.mrb[0].mxu0
    %v963 = vadd.f32 %v878, %v962
    %v964 = vpop.f32.mrb[0].mxu0
    %v965 = vpop.f32.mrb[0].mxu0
    %v966 = vpop.f32.mrb[0].mxu0
    %967 = vdwg.mxu0
    %v968 = vmax.f32 %v963, 0.0
    %v969 = vld [vmem:[%s7] sm:$0xf]
    %v970 = vld [vmem:[%s7 + $0x4] sm:$0xf]
    %v971 = vld [vmem:[%s7 + $0x8] sm:$0xf]
    %v972 = vld [vmem:[%s7 + $0xc] sm:$0xf]
    %v973 = vld [vmem:[%s7 + $0x10] sm:$0xf]
    %v974 = vld [vmem:[%s7 + $0x14] sm:$0xf]
    %v975 = vld [vmem:[%s7 + $0x18] sm:$0xf]
    %v976 = vld [vmem:[%s7 + $0x1c] sm:$0xf]
    %v977 = vld [vmem:[%s7 + $0x20] sm:$0xf]
    %v978 = vld [vmem:[%s7 + $0x24] sm:$0xf]
    %v979 = vld [vmem:[%s7 + $0x28] sm:$0xf]
    %v980 = vld [vmem:[%s7 + $0x2c] sm:$0xf]
    %v981 = vld [vmem:[%s7 + $0x30] sm:$0xf]
    %v982 = vld [vmem:[%s7 + $0x34] sm:$0xf]
    %v983 = vld [vmem:[%s7 + $0x38] sm:$0xf]
    %v984 = vld [vmem:[%s7 + $0x3c] sm:$0xf]
    %v985 = vld [vmem:[%s8] sm:$0x1]
    %v986 = vpack.c.bf16 %v968, %v968
    %v988 = vlaneseq
    %v989 = vshrl.u32 %v988, 7
    %v990 = vsub.s32 0, %v989
    %v991 = vrot.slane %v985, %v990
    %v1009 = vunpack.c.l.b16 %v969
    %v1010 = vunpack.c.l.b16 %v970
    %v1011 = vunpack.c.l.b16 %v971
    %v1012 = vunpack.c.l.b16 %v972
    %v1013 = vunpack.c.l.b16 %v973
    %v1014 = vunpack.c.l.b16 %v974
    %v1015 = vunpack.c.l.b16 %v975
    %v1016 = vunpack.c.l.b16 %v976
    %v1017 = vunpack.c.l.b16 %v977
    %v1018 = vunpack.c.l.b16 %v978
    %v1019 = vunpack.c.l.b16 %v979
    %v1020 = vunpack.c.l.b16 %v980
    %v1021 = vunpack.c.l.b16 %v981
    %v1022 = vunpack.c.l.b16 %v982
    %v1023 = vunpack.c.l.b16 %v983
    %v1024 = vunpack.c.l.b16 %v984
    %v1025 = vpack.c.b16 %v1010, %v1009
    %v1026 = vpack.c.b16 %v1012, %v1011
    %v1027 = vpack.c.b16 %v1014, %v1013
    %v1028 = vpack.c.b16 %v1016, %v1015
    %v1029 = vpack.c.b16 %v1018, %v1017
    %v1030 = vpack.c.b16 %v1020, %v1019
    %v1031 = vpack.c.b16 %v1022, %v1021
    %v1032 = vpack.c.b16 %v1024, %v1023
    %1041 = vmatprep.subr.bf16.mxu0 0
    %1042 = vmatpush1.bf16.msra.mxu0 %v1025
    %1043 = vmatprep.subr.bf16.mxu0 0
    %1044 = vmatpush1.bf16.msra.mxu0 %v1026
    %1045 = vmatprep.subr.bf16.mxu0 0
    %1046 = vmatpush1.bf16.msra.mxu0 %v1027
    %1047 = vmatprep.subr.bf16.mxu0 0
    %1048 = vmatpush1.bf16.msra.mxu0 %v1028
    %1049 = vmatprep.subr.bf16.mxu0 0
    %1050 = vmatpush1.bf16.msra.mxu0 %v1029
    %1051 = vmatprep.subr.bf16.mxu0 0
    %1052 = vmatpush1.bf16.msra.mxu0 %v1030
    %1053 = vmatprep.subr.bf16.mxu0 0
    %1054 = vmatpush1.bf16.msra.mxu0 %v1031
    %1055 = vmatprep.subr.bf16.mxu0 0
    %1056 = vmatpush1.bf16.msra.mxu0 %v1032
    %1057 = vmatprep.subr.bf16.mxu0 0
    %1058 = vmatpush1.bf16.msra.mxu0 0
    %1059 = vmatprep.subr.bf16.mxu0 0
    %1060 = vmatpush1.bf16.msra.mxu0 0
    %1061 = vmatprep.subr.bf16.mxu0 0
    %1062 = vmatpush1.bf16.msra.mxu0 0
    %1063 = vmatprep.subr.bf16.mxu0 0
    %1064 = vmatpush1.bf16.msra.mxu0 0
    %1065 = vmatprep.subr.bf16.mxu0 0
    %1066 = vmatpush1.bf16.msra.mxu0 0
    %1067 = vmatprep.subr.bf16.mxu0 0
    %1068 = vmatpush1.bf16.msra.mxu0 0
    %1069 = vmatprep.subr.bf16.mxu0 0
    %1070 = vmatpush1.bf16.msra.mxu0 0
    %1071 = vmatprep.subr.bf16.mxu0 0
    %1072 = vmatpush1.bf16.msra.mxu0 0
    %1073 = vmatprep.mubr.bf16.mxu0 0
    %1074 = vmatmul.mubr.bf16.gmra.mrb[0].mxu0 %v986
    %v1075 = vpop.f32.mrb[0].mxu0
    %v1076 = vadd.f32 %v991, %v1075
    %v1077 = vpop.f32.mrb[0].mxu0
    %v1078 = vpop.f32.mrb[0].mxu0
    %v1079 = vpop.f32.mrb[0].mxu0
    %1080 = vdwg.mxu0
    %1081 = vst [vmem:[%s9] sm:$0xff] %v1076
    // Predicated region
    $region42: #{mlp_forward.1} parent=1 // pred_check
      _
    $region43: #{mlp_forward.1} parent=1 // pred_check_branch
      %1083 = sbr.rel (0) target = $region45
    $region44: #{mlp_forward.1} parent=1 // pred_region
      _
    $region45: #{mlp_forward.1} parent=1 // pred_fallthru
      _
    // Predicated region
    $region46: #{mlp_forward.1} parent=1 // pred_check
      _
    $region47: #{mlp_forward.1} parent=1 // pred_check_branch
      %1085 = sbr.rel (0) target = $region49
    $region48: #{mlp_forward.1} parent=1 // pred_region
      _
    $region49: #{mlp_forward.1} parent=1 // pred_fallthru
      _
    %1086 = vsyncpa [#allocation3], 1

</llo_original>
